<compile_context>
chip_gen: v7x
topology: tpu7x:2x2x1
jax: 0.10.0
libtpu: 0.0.40
codegen_flags: <defaults>
</compile_context>

<pallas_src>
import jax
import jax.numpy as jnp
from jax import lax
from jax.experimental import pallas as pl
from jax.experimental.pallas import tpu as pltpu


def _round_up(x: int, m: int) -> int:
    return ((x + m - 1) // m) * m


def _make_kernel(Ws: int, S: int, PAD: int, C: int, Csub: int, Cout: int):
    """Per-batch-element kernel body (all sizes are static Python ints)."""

    def kernel(x_ref, w_ref, b11_ref, p1_ref, b12_ref, mask_ref, s_ref,
               out_ref, pad_ref):
        # ---- move11 -> PReLU -> move12 -> BinaryActivation (forward value = sign)
        # f32 VPU path; only the binarized result is cast to bf16 (exact: {-1,0,1}).
        x = x_ref[0]                                        # (C, S) f32, lane-dense
        v = x + b11_ref[...]
        v = jnp.where(v > 0, v, v * p1_ref[...])
        v = v + b12_ref[...]
        act = jnp.where(v > 0, 1.0, jnp.where(v < 0, -1.0, 0.0)).astype(jnp.bfloat16)
        if Csub > C:                                        # zero the padded
            act = jnp.concatenate(                          # contraction rows
                [act, jnp.zeros((Csub - C, S), jnp.bfloat16)], axis=0)

        # ---- zero-halo scratch for the conv.  Only the halo borders are zeroed
        # (never the full buffer); rewritten every step so correctness does not
        # depend on which TensorCore executed step 0 of the "parallel" batch axis.
        zero_halo = jnp.zeros((Csub, PAD), jnp.bfloat16)
        pad_ref[:, 0:PAD] = zero_halo
        pad_ref[:, PAD + S:PAD + S + PAD] = zero_halo
        pad_ref[:, PAD:PAD + S] = act                       # 128-aligned lane offset

        mask_l = mask_ref[0:1, :]                           # (1, S) bf16 {0,1}
        mask_r = mask_ref[1:2, :]

        # ---- 3x3 conv as 9 accumulating MXU matmuls straight off the shifted
        # views of the zero-halo scratch (no im2col buffer, no col stores).
        # dy = +-1 out-of-range rows land in the zero halo; dx = +-1 row-seam
        # wraps are killed by the precomputed column masks.
        acc = jnp.zeros((Cout, S), jnp.float32)
        t = 0
        for dy in (-1, 0, 1):
            for dx in (-1, 0, 1):
                start = PAD + dy * Ws + dx                  # static lane offset
                sl = pad_ref[:, start:start + S]            # (Csub, S) bf16
                if dx == -1:
                    sl = sl * mask_l
                elif dx == 1:
                    sl = sl * mask_r
                acc = acc + jnp.dot(w_ref[t], sl,
                                    preferred_element_type=jnp.float32)
                t += 1

        # ---- shortcut = scale * x (exact f32), duplicated over channels
        # (torch.cat((s, s), 1)); ONE full-width (Cout, S) output store.
        short = x * s_ref[0, 0]
        res = acc + jnp.concatenate([short, short], axis=0)
        out_ref[0] = res.astype(out_ref.dtype)

    return kernel


@jax.jit
def basic_block_transpose_modified_forward(x_nchw, params):
    N, Cin, H, W = x_nchw.shape
    assert Cin % 4 == 0
    C = Cin // 4                     # channels after PixelShuffle(2)
    Cout = 2 * C                     # planes = inplanes // 2 (required by the module)
    Hs, Ws = 2 * H, 2 * W
    S = Hs * Ws

    # PixelShuffle(2): the only wrapper-side layout op (one XLA transpose).
    x = x_nchw.astype(jnp.float32).reshape(N, C, 2, 2, H, W)
    x = jnp.transpose(x, (0, 1, 4, 2, 5, 3)).reshape(N, C, S)    # (N, C, S) lane-dense

    # Conv weight -> tap-major (9, Cout, Csub) bf16; tap t = ky*3 + kx.
    # Input-channel dim zero-padded to a sublane multiple -> aligned contractions.
    # bf16 weights + {-1,0,1} bf16 activations + f32 accumulation keep the conv
    # exact for bf16-representable weights.
    Csub = _round_up(C, 8)
    w9 = jnp.transpose(params["w"].astype(jnp.float32), (2, 3, 0, 1)).reshape(9, Cout, C)
    if Csub != C:
        w9 = jnp.pad(w9, ((0, 0), (0, 0), (0, Csub - C)))
    w9 = w9.astype(jnp.bfloat16)

    b11 = params["b11"].reshape(C, 1).astype(jnp.float32)
    p1 = params["p1"].reshape(C, 1).astype(jnp.float32)
    b12 = params["b12"].reshape(C, 1).astype(jnp.float32)
    scale = params["scale"].reshape(1, 1).astype(jnp.float32)

    # dx = -1 / +1 column masks (kill the flattened row-seam wrap); exact bf16 {0,1}.
    col = jnp.arange(S, dtype=jnp.int32) % Ws
    mask = jnp.stack([(col != 0), (col != Ws - 1)], axis=0).astype(jnp.bfloat16)

    PAD = _round_up(Ws + 1, 128)     # zero halo >= Ws+1, 128-aligned act store

    # Explicit VMEM budget: double-buffered in/out blocks + scratch + f32
    # accumulator/temps + slack; never below the platform defaults, <= 64 MiB.
    est = (2 * C * S * 4                 # input blocks (x2 pipeline buffers)
           + 2 * Cout * S * 4            # output blocks (x2 pipeline buffers)
           + Csub * (S + 2 * PAD) * 2    # bf16 zero-halo scratch
           + 2 * Cout * S * 4            # f32 accumulator + matmul temporaries
           + (2 << 20))                  # weights / biases / masks / slack
    vmem_limit = int(min(64 << 20, max(32 << 20, 2 * est)))

    kernel = _make_kernel(Ws, S, PAD, C, Csub, Cout)
    i3 = lambda b: (b, 0, 0)
    z3 = lambda b: (0, 0, 0)
    z2 = lambda b: (0, 0)
    out_flat = pl.pallas_call(
        kernel,
        out_shape=jax.ShapeDtypeStruct((N, Cout, S), jnp.float32),
        grid_spec=pltpu.PrefetchScalarGridSpec(
            num_scalar_prefetch=0,
            grid=(N,),
            in_specs=[
                pl.BlockSpec((1, C, S), i3),          # pixel-shuffled input (f32)
                pl.BlockSpec((9, Cout, Csub), z3),    # tap-major conv weights (bf16)
                pl.BlockSpec((C, 1), z2),             # move11 bias
                pl.BlockSpec((C, 1), z2),             # PReLU per-channel weight
                pl.BlockSpec((C, 1), z2),             # move12 bias
                pl.BlockSpec((2, S), z2),             # dx column masks (bf16)
                pl.BlockSpec((1, 1), z2),             # LearnableScale scalar
            ],
            out_specs=pl.BlockSpec((1, Cout, S), i3),
            scratch_shapes=[
                pltpu.VMEM((Csub, S + 2 * PAD), jnp.bfloat16),   # zero-halo act
            ],
        ),
        compiler_params=pltpu.CompilerParams(
            # TODO(synk): pltpu.CORE_PARALLEL on this axis for v7x (2 TCs/chip).
            dimension_semantics=("parallel",),
            vmem_limit_bytes=vmem_limit),
    )(x, w9, b11, p1, b12, mask, scale)

    # Output is already flat NCHW -> free reshape, no transpose / extra HBM pass.
    return out_flat.reshape(N, Cout, Hs, Ws)


# ----------------------------- pure-JAX reference ------------------------------

def basic_block_transpose_modified_reference(x_nchw, params):
    N, Cin, H, W = x_nchw.shape
    C = Cin // 4
    x = x_nchw.astype(jnp.float32).reshape(N, C, 2, 2, H, W)
    x = jnp.transpose(x, (0, 1, 4, 2, 5, 3)).reshape(N, C, 2 * H, 2 * W)

    t = x + params["b11"].reshape(1, C, 1, 1)
    t = jnp.where(t > 0, t, t * params["p1"].reshape(1, C, 1, 1))
    t = t + params["b12"].reshape(1, C, 1, 1)
    t = jnp.sign(t)

    y = lax.conv_general_dilated(
        t, params["w"].astype(jnp.float32),
        window_strides=(1, 1), padding=((1, 1), (1, 1)),
        dimension_numbers=("NCHW", "OIHW", "NCHW"),
        precision=lax.Precision.HIGHEST)

    short = x * params["scale"].reshape(1, 1, 1, 1)
    return y + jnp.concatenate([short, short], axis=1)


def init_params(key, inplanes):
    C = inplanes // 4
    Cout = 2 * C
    ks = jax.random.split(key, 5)
    nrm = lambda k, shape, s: jax.random.normal(k, shape, jnp.float32) * s
    # bf16-representable test weights: keeps the correctness check independent of
    # how the MXU executes the conv (bf16 weight path is then exact).
    w = nrm(ks[0], (Cout, C, 3, 3), 0.1).astype(jnp.bfloat16).astype(jnp.float32)
    return {
        "w": w,                                                   # Conv2d weight (OIHW)
        "b11": nrm(ks[1], (C,), 0.1),                             # LearnableBias move11
        "b12": nrm(ks[2], (C,), 0.1),                             # LearnableBias move12
        "p1": jnp.full((C,), 0.25, jnp.float32) + nrm(ks[3], (C,), 0.05),  # PReLU
        "scale": jnp.ones((1,), jnp.float32) + nrm(ks[4], (1,), 0.05),     # LearnableScale
    }


if __name__ == "__main__":
    key = jax.random.PRNGKey(0)
    kx, kp = jax.random.split(key)

    # inplanes=16 -> after PixelShuffle(2): (2, 4, 16, 16); planes = inplanes // 2 = 8
    N, inplanes, H, W = 2, 16, 8, 8
    x = jax.random.normal(kx, (N, inplanes, H, W), jnp.float32)
    params = init_params(kp, inplanes)

    out = jax.block_until_ready(basic_block_transpose_modified_forward(x, params))
    ref = jax.block_until_ready(basic_block_transpose_modified_reference(x, params))

    assert out.shape == (N, inplanes // 2, 2 * H, 2 * W), out.shape
    max_err = float(jnp.max(jnp.abs(out - ref)))
    assert jnp.allclose(out, ref, atol=1e-3, rtol=1e-3), max_err
    print("KERNEL_OK")
</pallas_src>

<mosaic_0001>
module attributes {stable_mosaic.version = 11 : i64} {
  func.func @kernel(%arg0: i32, %arg1: memref<1x4x256xf32, #tpu.memory_space<vmem>>, %arg2: memref<9x8x8xbf16, #tpu.memory_space<vmem>>, %arg3: memref<4x1xf32, #tpu.memory_space<vmem>>, %arg4: memref<4x1xf32, #tpu.memory_space<vmem>>, %arg5: memref<4x1xf32, #tpu.memory_space<vmem>>, %arg6: memref<2x256xbf16, #tpu.memory_space<vmem>>, %arg7: memref<1x1xf32, #tpu.memory_space<vmem>>, %arg8: memref<1x8x256xf32, #tpu.memory_space<vmem>>, %arg9: memref<8x512xbf16, #tpu.memory_space<vmem>>) attributes {dimension_semantics = [#tpu.dimension_semantics<parallel>], iteration_bounds = array<i64: 2>, scalar_prefetch = 0 : i64, scratch_operands = 1 : i64, tpu.core_type = #tpu.core_type<tc>, window_params = [{transform_indices = @transform_0, window_bounds = array<i64: 1, 4, 256>}, {pipeline_mode = #tpu.pipeline_mode<synchronous>, transform_indices = @transform_1, window_bounds = array<i64: 9, 8, 8>}, {pipeline_mode = #tpu.pipeline_mode<synchronous>, transform_indices = @transform_2, window_bounds = array<i64: 4, 1>}, {pipeline_mode = #tpu.pipeline_mode<synchronous>, transform_indices = @transform_3, window_bounds = array<i64: 4, 1>}, {pipeline_mode = #tpu.pipeline_mode<synchronous>, transform_indices = @transform_4, window_bounds = array<i64: 4, 1>}, {pipeline_mode = #tpu.pipeline_mode<synchronous>, transform_indices = @transform_5, window_bounds = array<i64: 2, 256>}, {pipeline_mode = #tpu.pipeline_mode<synchronous>, transform_indices = @transform_6, window_bounds = array<i64: 1, 1>}, {transform_indices = @transform_7, window_bounds = array<i64: 1, 8, 256>}]} {
    %c0 = arith.constant 0 : index
    %c0_0 = arith.constant 0 : index
    %c0_1 = arith.constant 0 : index
    %0 = vector.load %arg1[%c0, %c0_0, %c0_1] : memref<1x4x256xf32, #tpu.memory_space<vmem>>, vector<1x4x256xf32>
    %1 = vector.shape_cast %0 : vector<1x4x256xf32> to vector<4x256xf32>
    %c0_2 = arith.constant 0 : index
    %c0_3 = arith.constant 0 : index
    %2 = vector.load %arg3[%c0_2, %c0_3] : memref<4x1xf32, #tpu.memory_space<vmem>>, vector<4x1xf32>
    %3 = vector.broadcast %2 : vector<4x1xf32> to vector<4x256xf32>
    %4 = arith.addf %1, %3 : vector<4x256xf32>
    %cst = arith.constant 0.000000e+00 : f32
    %5 = vector.broadcast %cst : f32 to vector<4x256xf32>
    %6 = arith.cmpf ogt, %4, %5 : vector<4x256xf32>
    %c0_4 = arith.constant 0 : index
    %c0_5 = arith.constant 0 : index
    %7 = vector.load %arg4[%c0_4, %c0_5] : memref<4x1xf32, #tpu.memory_space<vmem>>, vector<4x1xf32>
    %8 = vector.broadcast %7 : vector<4x1xf32> to vector<4x256xf32>
    %9 = arith.mulf %4, %8 : vector<4x256xf32>
    %10 = arith.select %6, %4, %9 : vector<4x256xi1>, vector<4x256xf32>
    %c0_6 = arith.constant 0 : index
    %c0_7 = arith.constant 0 : index
    %11 = vector.load %arg5[%c0_6, %c0_7] : memref<4x1xf32, #tpu.memory_space<vmem>>, vector<4x1xf32>
    %12 = vector.broadcast %11 : vector<4x1xf32> to vector<4x256xf32>
    %13 = arith.addf %10, %12 : vector<4x256xf32>
    %cst_8 = arith.constant 0.000000e+00 : f32
    %14 = vector.broadcast %cst_8 : f32 to vector<4x256xf32>
    %15 = arith.cmpf ogt, %13, %14 : vector<4x256xf32>
    %cst_9 = arith.constant 0.000000e+00 : f32
    %16 = vector.broadcast %cst_9 : f32 to vector<4x256xf32>
    %17 = arith.cmpf olt, %13, %16 : vector<4x256xf32>
    %cst_10 = arith.constant -1.000000e+00 : f32
    %cst_11 = arith.constant 0.000000e+00 : f32
    %18 = vector.broadcast %cst_10 : f32 to vector<4x256xf32>
    %19 = vector.broadcast %cst_11 : f32 to vector<4x256xf32>
    %20 = arith.select %17, %18, %19 : vector<4x256xi1>, vector<4x256xf32>
    %cst_12 = arith.constant 1.000000e+00 : f32
    %21 = vector.broadcast %cst_12 : f32 to vector<4x256xf32>
    %22 = arith.select %15, %21, %20 : vector<4x256xi1>, vector<4x256xf32>
    %23 = arith.truncf %22 : vector<4x256xf32> to vector<4x256xbf16>
    %cst_13 = arith.constant 0.000000e+00 : bf16
    %24 = vector.broadcast %cst_13 : bf16 to vector<4x256xbf16>
    %25 = tpu.concatenate %23, %24 in 0 : vector<4x256xbf16>, vector<4x256xbf16> -> vector<8x256xbf16>
    %cst_14 = arith.constant 0.000000e+00 : bf16
    %26 = vector.broadcast %cst_14 : bf16 to vector<8x128xbf16>
    %c0_15 = arith.constant 0 : index
    %c0_16 = arith.constant 0 : index
    %27 = vector.load %arg9[%c0_15, %c0_16] : memref<8x512xbf16, #tpu.memory_space<vmem>>, vector<8x128xbf16>
    tpu.vector_store %arg9[%c0_15, %c0_16], %26 {strides = array<i32>} : memref<8x512xbf16, #tpu.memory_space<vmem>>, vector<8x128xbf16>,
    %c0_17 = arith.constant 0 : index
    %c384 = arith.constant 384 : index
    %28 = vector.load %arg9[%c0_17, %c384] : memref<8x512xbf16, #tpu.memory_space<vmem>>, vector<8x128xbf16>
    tpu.vector_store %arg9[%c0_17, %c384], %26 {strides = array<i32>} : memref<8x512xbf16, #tpu.memory_space<vmem>>, vector<8x128xbf16>,
    %c0_18 = arith.constant 0 : index
    %c128 = arith.constant 128 : index
    %29 = vector.load %arg9[%c0_18, %c128] : memref<8x512xbf16, #tpu.memory_space<vmem>>, vector<8x256xbf16>
    tpu.vector_store %arg9[%c0_18, %c128], %25 {strides = array<i32>} : memref<8x512xbf16, #tpu.memory_space<vmem>>, vector<8x256xbf16>,
    %c0_19 = arith.constant 0 : index
    %c0_20 = arith.constant 0 : index
    %30 = vector.load %arg6[%c0_19, %c0_20] : memref<2x256xbf16, #tpu.memory_space<vmem>>, vector<1x256xbf16>
    %c1 = arith.constant 1 : index
    %c0_21 = arith.constant 0 : index
    %31 = vector.load %arg6[%c1, %c0_21] : memref<2x256xbf16, #tpu.memory_space<vmem>>, vector<1x256xbf16>
    %cst_22 = arith.constant 0.000000e+00 : f32
    %32 = vector.broadcast %cst_22 : f32 to vector<8x256xf32>
    %c0_23 = arith.constant 0 : index
    %c111 = arith.constant 111 : index
    %33 = vector.load %arg9[%c0_23, %c111] : memref<8x512xbf16, #tpu.memory_space<vmem>>, vector<8x256xbf16>
    %34 = vector.broadcast %30 : vector<1x256xbf16> to vector<8x256xbf16>
    %35 = arith.mulf %33, %34 : vector<8x256xbf16>
    %c0_24 = arith.constant 0 : index
    %c0_25 = arith.constant 0 : index
    %c0_26 = arith.constant 0 : index
    %36 = vector.load %arg2[%c0_24, %c0_25, %c0_26] : memref<9x8x8xbf16, #tpu.memory_space<vmem>>, vector<1x8x8xbf16>
    %37 = vector.shape_cast %36 : vector<1x8x8xbf16> to vector<8x8xbf16>
    %cst_27 = arith.constant dense<0.000000e+00> : vector<8x256xf32>
    %38 = tpu.matmul %37, %35, %cst_27 {dimension_numbers = #tpu.dot_dimension_numbers<[1], [0], [0], [1], [0, 0, 1, 1], [], []>} : vector<8x8xbf16>, vector<8x256xbf16>, vector<8x256xf32> -> vector<8x256xf32>
    %39 = arith.addf %32, %38 : vector<8x256xf32>
    %c0_28 = arith.constant 0 : index
    %c112 = arith.constant 112 : index
    %40 = vector.load %arg9[%c0_28, %c112] : memref<8x512xbf16, #tpu.memory_space<vmem>>, vector<8x256xbf16>
    %c1_29 = arith.constant 1 : index
    %c0_30 = arith.constant 0 : index
    %c0_31 = arith.constant 0 : index
    %41 = vector.load %arg2[%c1_29, %c0_30, %c0_31] : memref<9x8x8xbf16, #tpu.memory_space<vmem>>, vector<1x8x8xbf16>
    %42 = vector.shape_cast %41 : vector<1x8x8xbf16> to vector<8x8xbf16>
    %cst_32 = arith.constant dense<0.000000e+00> : vector<8x256xf32>
    %43 = tpu.matmul %42, %40, %cst_32 {dimension_numbers = #tpu.dot_dimension_numbers<[1], [0], [0], [1], [0, 0, 1, 1], [], []>} : vector<8x8xbf16>, vector<8x256xbf16>, vector<8x256xf32> -> vector<8x256xf32>
    %44 = arith.addf %39, %43 : vector<8x256xf32>
    %c0_33 = arith.constant 0 : index
    %c113 = arith.constant 113 : index
    %45 = vector.load %arg9[%c0_33, %c113] : memref<8x512xbf16, #tpu.memory_space<vmem>>, vector<8x256xbf16>
    %46 = vector.broadcast %31 : vector<1x256xbf16> to vector<8x256xbf16>
    %47 = arith.mulf %45, %46 : vector<8x256xbf16>
    %c2 = arith.constant 2 : index
    %c0_34 = arith.constant 0 : index
    %c0_35 = arith.constant 0 : index
    %48 = vector.load %arg2[%c2, %c0_34, %c0_35] : memref<9x8x8xbf16, #tpu.memory_space<vmem>>, vector<1x8x8xbf16>
    %49 = vector.shape_cast %48 : vector<1x8x8xbf16> to vector<8x8xbf16>
    %cst_36 = arith.constant dense<0.000000e+00> : vector<8x256xf32>
    %50 = tpu.matmul %49, %47, %cst_36 {dimension_numbers = #tpu.dot_dimension_numbers<[1], [0], [0], [1], [0, 0, 1, 1], [], []>} : vector<8x8xbf16>, vector<8x256xbf16>, vector<8x256xf32> -> vector<8x256xf32>
    %51 = arith.addf %44, %50 : vector<8x256xf32>
    %c0_37 = arith.constant 0 : index
    %c127 = arith.constant 127 : index
    %52 = vector.load %arg9[%c0_37, %c127] : memref<8x512xbf16, #tpu.memory_space<vmem>>, vector<8x256xbf16>
    %53 = vector.broadcast %30 : vector<1x256xbf16> to vector<8x256xbf16>
    %54 = arith.mulf %52, %53 : vector<8x256xbf16>
    %c3 = arith.constant 3 : index
    %c0_38 = arith.constant 0 : index
    %c0_39 = arith.constant 0 : index
    %55 = vector.load %arg2[%c3, %c0_38, %c0_39] : memref<9x8x8xbf16, #tpu.memory_space<vmem>>, vector<1x8x8xbf16>
    %56 = vector.shape_cast %55 : vector<1x8x8xbf16> to vector<8x8xbf16>
    %cst_40 = arith.constant dense<0.000000e+00> : vector<8x256xf32>
    %57 = tpu.matmul %56, %54, %cst_40 {dimension_numbers = #tpu.dot_dimension_numbers<[1], [0], [0], [1], [0, 0, 1, 1], [], []>} : vector<8x8xbf16>, vector<8x256xbf16>, vector<8x256xf32> -> vector<8x256xf32>
    %58 = arith.addf %51, %57 : vector<8x256xf32>
    %c0_41 = arith.constant 0 : index
    %c128_42 = arith.constant 128 : index
    %59 = vector.load %arg9[%c0_41, %c128_42] : memref<8x512xbf16, #tpu.memory_space<vmem>>, vector<8x256xbf16>
    %c4 = arith.constant 4 : index
    %c0_43 = arith.constant 0 : index
    %c0_44 = arith.constant 0 : index
    %60 = vector.load %arg2[%c4, %c0_43, %c0_44] : memref<9x8x8xbf16, #tpu.memory_space<vmem>>, vector<1x8x8xbf16>
    %61 = vector.shape_cast %60 : vector<1x8x8xbf16> to vector<8x8xbf16>
    %cst_45 = arith.constant dense<0.000000e+00> : vector<8x256xf32>
    %62 = tpu.matmul %61, %59, %cst_45 {dimension_numbers = #tpu.dot_dimension_numbers<[1], [0], [0], [1], [0, 0, 1, 1], [], []>} : vector<8x8xbf16>, vector<8x256xbf16>, vector<8x256xf32> -> vector<8x256xf32>
    %63 = arith.addf %58, %62 : vector<8x256xf32>
    %c0_46 = arith.constant 0 : index
    %c129 = arith.constant 129 : index
    %64 = vector.load %arg9[%c0_46, %c129] : memref<8x512xbf16, #tpu.memory_space<vmem>>, vector<8x256xbf16>
    %65 = vector.broadcast %31 : vector<1x256xbf16> to vector<8x256xbf16>
    %66 = arith.mulf %64, %65 : vector<8x256xbf16>
    %c5 = arith.constant 5 : index
    %c0_47 = arith.constant 0 : index
    %c0_48 = arith.constant 0 : index
    %67 = vector.load %arg2[%c5, %c0_47, %c0_48] : memref<9x8x8xbf16, #tpu.memory_space<vmem>>, vector<1x8x8xbf16>
    %68 = vector.shape_cast %67 : vector<1x8x8xbf16> to vector<8x8xbf16>
    %cst_49 = arith.constant dense<0.000000e+00> : vector<8x256xf32>
    %69 = tpu.matmul %68, %66, %cst_49 {dimension_numbers = #tpu.dot_dimension_numbers<[1], [0], [0], [1], [0, 0, 1, 1], [], []>} : vector<8x8xbf16>, vector<8x256xbf16>, vector<8x256xf32> -> vector<8x256xf32>
    %70 = arith.addf %63, %69 : vector<8x256xf32>
    %c0_50 = arith.constant 0 : index
    %c143 = arith.constant 143 : index
    %71 = vector.load %arg9[%c0_50, %c143] : memref<8x512xbf16, #tpu.memory_space<vmem>>, vector<8x256xbf16>
    %72 = vector.broadcast %30 : vector<1x256xbf16> to vector<8x256xbf16>
    %73 = arith.mulf %71, %72 : vector<8x256xbf16>
    %c6 = arith.constant 6 : index
    %c0_51 = arith.constant 0 : index
    %c0_52 = arith.constant 0 : index
    %74 = vector.load %arg2[%c6, %c0_51, %c0_52] : memref<9x8x8xbf16, #tpu.memory_space<vmem>>, vector<1x8x8xbf16>
    %75 = vector.shape_cast %74 : vector<1x8x8xbf16> to vector<8x8xbf16>
    %cst_53 = arith.constant dense<0.000000e+00> : vector<8x256xf32>
    %76 = tpu.matmul %75, %73, %cst_53 {dimension_numbers = #tpu.dot_dimension_numbers<[1], [0], [0], [1], [0, 0, 1, 1], [], []>} : vector<8x8xbf16>, vector<8x256xbf16>, vector<8x256xf32> -> vector<8x256xf32>
    %77 = arith.addf %70, %76 : vector<8x256xf32>
    %c0_54 = arith.constant 0 : index
    %c144 = arith.constant 144 : index
    %78 = vector.load %arg9[%c0_54, %c144] : memref<8x512xbf16, #tpu.memory_space<vmem>>, vector<8x256xbf16>
    %c7 = arith.constant 7 : index
    %c0_55 = arith.constant 0 : index
    %c0_56 = arith.constant 0 : index
    %79 = vector.load %arg2[%c7, %c0_55, %c0_56] : memref<9x8x8xbf16, #tpu.memory_space<vmem>>, vector<1x8x8xbf16>
    %80 = vector.shape_cast %79 : vector<1x8x8xbf16> to vector<8x8xbf16>
    %cst_57 = arith.constant dense<0.000000e+00> : vector<8x256xf32>
    %81 = tpu.matmul %80, %78, %cst_57 {dimension_numbers = #tpu.dot_dimension_numbers<[1], [0], [0], [1], [0, 0, 1, 1], [], []>} : vector<8x8xbf16>, vector<8x256xbf16>, vector<8x256xf32> -> vector<8x256xf32>
    %82 = arith.addf %77, %81 : vector<8x256xf32>
    %c0_58 = arith.constant 0 : index
    %c145 = arith.constant 145 : index
    %83 = vector.load %arg9[%c0_58, %c145] : memref<8x512xbf16, #tpu.memory_space<vmem>>, vector<8x256xbf16>
    %84 = vector.broadcast %31 : vector<1x256xbf16> to vector<8x256xbf16>
    %85 = arith.mulf %83, %84 : vector<8x256xbf16>
    %c8 = arith.constant 8 : index
    %c0_59 = arith.constant 0 : index
    %c0_60 = arith.constant 0 : index
    %86 = vector.load %arg2[%c8, %c0_59, %c0_60] : memref<9x8x8xbf16, #tpu.memory_space<vmem>>, vector<1x8x8xbf16>
    %87 = vector.shape_cast %86 : vector<1x8x8xbf16> to vector<8x8xbf16>
    %cst_61 = arith.constant dense<0.000000e+00> : vector<8x256xf32>
    %88 = tpu.matmul %87, %85, %cst_61 {dimension_numbers = #tpu.dot_dimension_numbers<[1], [0], [0], [1], [0, 0, 1, 1], [], []>} : vector<8x8xbf16>, vector<8x256xbf16>, vector<8x256xf32> -> vector<8x256xf32>
    %89 = arith.addf %82, %88 : vector<8x256xf32>
    %c0_62 = arith.constant 0 : index
    %c0_63 = arith.constant 0 : index
    %90 = vector.load %arg7[%c0_62, %c0_63] : memref<1x1xf32, #tpu.memory_space<vmem>>, vector<1x1xf32>
    %91 = vector.extract %90[0, 0] : f32 from vector<1x1xf32>
    %92 = vector.broadcast %91 : f32 to vector<4x256xf32>
    %93 = arith.mulf %1, %92 : vector<4x256xf32>
    %94 = tpu.concatenate %93, %93 in 0 : vector<4x256xf32>, vector<4x256xf32> -> vector<8x256xf32>
    %95 = arith.addf %89, %94 : vector<8x256xf32>
    %c0_64 = arith.constant 0 : index
    %c0_65 = arith.constant 0 : index
    %c0_66 = arith.constant 0 : index
    %96 = vector.load %arg8[%c0_64, %c0_65, %c0_66] : memref<1x8x256xf32, #tpu.memory_space<vmem>>, vector<1x8x256xf32>
    %97 = vector.shape_cast %96 : vector<1x8x256xf32> to vector<8x256xf32>
    %98 = vector.shape_cast %95 : vector<8x256xf32> to vector<1x8x256xf32>
    tpu.vector_store %arg8[%c0_64, %c0_65, %c0_66], %98 {strides = array<i32>} : memref<1x8x256xf32, #tpu.memory_space<vmem>>, vector<1x8x256xf32>,
    return
  }
  func.func @transform_0(%arg0: i32) -> (i32, i32, i32) {
    %c0_i32 = arith.constant 0 : i32
    %c0_i32_0 = arith.constant 0 : i32
    %c0_i32_1 = arith.constant 0 : i32
    return %arg0, %c0_i32, %c0_i32_0 : i32, i32, i32
  }
  func.func @transform_1(%arg0: i32) -> (i32, i32, i32) {
    %c0_i32 = arith.constant 0 : i32
    %c0_i32_0 = arith.constant 0 : i32
    %c0_i32_1 = arith.constant 0 : i32
    %c0_i32_2 = arith.constant 0 : i32
    return %c0_i32, %c0_i32_0, %c0_i32_1 : i32, i32, i32
  }
  func.func @transform_2(%arg0: i32) -> (i32, i32) {
    %c0_i32 = arith.constant 0 : i32
    %c0_i32_0 = arith.constant 0 : i32
    %c0_i32_1 = arith.constant 0 : i32
    return %c0_i32, %c0_i32_0 : i32, i32
  }
  func.func @transform_3(%arg0: i32) -> (i32, i32) {
    %c0_i32 = arith.constant 0 : i32
    %c0_i32_0 = arith.constant 0 : i32
    %c0_i32_1 = arith.constant 0 : i32
    return %c0_i32, %c0_i32_0 : i32, i32
  }
  func.func @transform_4(%arg0: i32) -> (i32, i32) {
    %c0_i32 = arith.constant 0 : i32
    %c0_i32_0 = arith.constant 0 : i32
    %c0_i32_1 = arith.constant 0 : i32
    return %c0_i32, %c0_i32_0 : i32, i32
  }
  func.func @transform_5(%arg0: i32) -> (i32, i32) {
    %c0_i32 = arith.constant 0 : i32
    %c0_i32_0 = arith.constant 0 : i32
    %c0_i32_1 = arith.constant 0 : i32
    return %c0_i32, %c0_i32_0 : i32, i32
  }
  func.func @transform_6(%arg0: i32) -> (i32, i32) {
    %c0_i32 = arith.constant 0 : i32
    %c0_i32_0 = arith.constant 0 : i32
    %c0_i32_1 = arith.constant 0 : i32
    return %c0_i32, %c0_i32_0 : i32, i32
  }
  func.func @transform_7(%arg0: i32) -> (i32, i32, i32) {
    %c0_i32 = arith.constant 0 : i32
    %c0_i32_0 = arith.constant 0 : i32
    %c0_i32_1 = arith.constant 0 : i32
    return %arg0, %c0_i32, %c0_i32_0 : i32, i32, i32
  }
}

</mosaic_0001>

<llo_original>
// kernel: basic_block_transpose_modified_forward.1
$region0: #{basic_block_transpose_modified_forward.1}
  #allocation0 [shape = 'u32[]', space=smem, size = 0x4, offset = 0x4, fixed_abs, tag = 'smem constant byte address 0x4 - core index']
  #allocation1 [shape = 'u32[144,128]{1,0:T(1,128)}', space=vmem, size = 0x12000, scoped, tag = 'internal scratch']
  #allocation2 [shape = 'bf16[8,512]{1,0:T(8,128)(2,1)}', space=vmem, size = 0x2000, scoped, tag = 'scratch operand']
  #allocation3 [shape = 'f32[1,1]{1,0:T(1,128)S(1)}', space=vmem, size = 0x200, scoped, tag = 'scoped memory for basic_block_transpose_modified_forward.1']
  %s0 = inlined_call_operand.vmem [shape: f32[2,4,256], index: 0, kind: input, shape index: {}]
  %s1 = inlined_call_operand.vmem [shape: bf16[9,8,8], index: 1, kind: input, shape index: {}]
  %s2 = inlined_call_operand.vmem [shape: f32[4,1], index: 2, kind: input, shape index: {}]
  %s3 = inlined_call_operand.vmem [shape: f32[4,1], index: 3, kind: input, shape index: {}]
  %s4 = inlined_call_operand.vmem [shape: f32[4,1], index: 4, kind: input, shape index: {}]
  %s5 = inlined_call_operand.vmem [shape: bf16[2,256], index: 5, kind: input, shape index: {}]
  %s6 = inlined_call_operand.<no memory space> [shape: f32[1,1], index: 6, kind: input, shape index: {}]
  %s7 = inlined_call_operand.vmem [shape: f32[2,8,256], index: 7, kind: output, shape index: {}]
  %s8 = sld [smem:[#allocation0]]
  $region61: #{basic_block_transpose_modified_forward.1} parent=0
    _
  %s10 = ssub.s32 1, %s8
  %s11 = scalar_select 0, %s10, %s8
  %v12 = vstv %s6
  %13 = vst [vmem:[#allocation3] sm:$0x1] %v12
  loop: start=0, step=1, limit=4
  $region2: #{basic_block_transpose_modified_forward.1} parent=0 // loop_pre_header
    _
  $region3: #{basic_block_transpose_modified_forward.1} parent=0 // loop_header
    %s15 = sphi 0, %s19
    %p16 = scmp.ge.s32.totalorder %s15, 4
    %s25 = sphi 0, %s27
    %s28 = sphi 0, %s25
    %s29 = sphi 0, %s28
    %s45 = sphi 0, %s29
    %s49 = sphi 0, %s49
    %s51 = sphi 0, %s49
    %s52 = sphi 0, %s51
    %s66 = sphi 0, %s52
    %s70 = sphi 0, %s70
    %s72 = sphi 0, %s70
    %s73 = sphi 0, %s72
    %s87 = sphi 0, %s73
    %s91 = sphi 0, %s91
    %s93 = sphi 0, %s91
    %s94 = sphi 0, %s93
    %s108 = sphi 0, %s94
    %s112 = sphi 0, %s112
    %s114 = sphi 0, %s112
    %s115 = sphi 0, %s114
    %s129 = sphi 0, %s115
    %s133 = sphi 0, %s133
    %s135 = sphi 0, %s133
    %s136 = sphi 0, %s135
    %s150 = sphi 0, %s136
    %s154 = sphi 0, %s154
    %s156 = sphi 0, %s154
    %s157 = sphi 0, %s156
    %s171 = sphi 0, %s157
    %s177 = sphi 0, %s179
    %s180 = sphi 0, %s177
    %s181 = sphi 0, %s180
    %s197 = sphi 0, %s181
  $region4: #{basic_block_transpose_modified_forward.1} parent=0 // loop_header_branch
    %18 = sbr.rel (%p16) target = $region8
  $region5: #{basic_block_transpose_modified_forward.1} parent=0 // loop_body
    %s20 = ssub.s32 %s15, 1
    %s21 = ssub.s32 %s15, 2
    %s22 = sadd.s32 %s15, 1
    %s23 = ssub.s32 %s15, %s22
    %p24 = scmp.eq.s32.totalorder %s23, 0
    %s26 = sadd.s32 %s25, 1
    %s27 = scalar_select %p24, %s25, %s26
    %p30 = pneg %p24
    %p31 = scmp.eq.s32.totalorder %s15, 1
    %p32 = por %p30, %p31
    %p33 = scmp.ne.s32.totalorder %s25, %s28
    %p34 = scmp.eq.s32.totalorder %s15, 0
    %p35 = por %p33, %p34
    %p36 = scmp.ne.s32.totalorder %s25, %s28
    %p37 = scmp.eq.s32.totalorder %s20, 1
    %p38 = por %p36, %p37
    %p39 = scmp.ne.s32.totalorder %s28, %s29
    %p40 = scmp.eq.s32.totalorder %s20, 0
    %p41 = por %p39, %p40
    %p42 = scmp.ne.s32.totalorder %s28, %s29
    %p43 = scmp.eq.s32.totalorder %s21, 1
    %p44 = por %p42, %p43
    %p46 = scmp.ne.s32.totalorder %s29, %s45
    %p47 = scmp.eq.s32.totalorder %s21, 0
    %p48 = por %p46, %p47
    %s50 = sadd.s32 %s49, 1
    %p53 = scmp.eq.s32.totalorder %s15, 1
    %p54 = scmp.ne.s32.totalorder %s49, %s51
    %p55 = scmp.eq.s32.totalorder %s15, 0
    %p56 = por %p54, %p55
    %p57 = scmp.ne.s32.totalorder %s49, %s51
    %p58 = scmp.eq.s32.totalorder %s20, 1
    %p59 = por %p57, %p58
    %p60 = scmp.ne.s32.totalorder %s51, %s52
    %p61 = scmp.eq.s32.totalorder %s20, 0
    %p62 = por %p60, %p61
    %p63 = scmp.ne.s32.totalorder %s51, %s52
    %p64 = scmp.eq.s32.totalorder %s21, 1
    %p65 = por %p63, %p64
    %p67 = scmp.ne.s32.totalorder %s52, %s66
    %p68 = scmp.eq.s32.totalorder %s21, 0
    %p69 = por %p67, %p68
    %s71 = sadd.s32 %s70, 1
    %p74 = scmp.eq.s32.totalorder %s15, 1
    %p75 = scmp.ne.s32.totalorder %s70, %s72
    %p76 = scmp.eq.s32.totalorder %s15, 0
    %p77 = por %p75, %p76
    %p78 = scmp.ne.s32.totalorder %s70, %s72
    %p79 = scmp.eq.s32.totalorder %s20, 1
    %p80 = por %p78, %p79
    %p81 = scmp.ne.s32.totalorder %s72, %s73
    %p82 = scmp.eq.s32.totalorder %s20, 0
    %p83 = por %p81, %p82
    %p84 = scmp.ne.s32.totalorder %s72, %s73
    %p85 = scmp.eq.s32.totalorder %s21, 1
    %p86 = por %p84, %p85
    %p88 = scmp.ne.s32.totalorder %s73, %s87
    %p89 = scmp.eq.s32.totalorder %s21, 0
    %p90 = por %p88, %p89
    %s92 = sadd.s32 %s91, 1
    %p95 = scmp.eq.s32.totalorder %s15, 1
    %p96 = scmp.ne.s32.totalorder %s91, %s93
    %p97 = scmp.eq.s32.totalorder %s15, 0
    %p98 = por %p96, %p97
    %p99 = scmp.ne.s32.totalorder %s91, %s93
    %p100 = scmp.eq.s32.totalorder %s20, 1
    %p101 = por %p99, %p100
    %p102 = scmp.ne.s32.totalorder %s93, %s94
    %p103 = scmp.eq.s32.totalorder %s20, 0
    %p104 = por %p102, %p103
    %p105 = scmp.ne.s32.totalorder %s93, %s94
    %p106 = scmp.eq.s32.totalorder %s21, 1
    %p107 = por %p105, %p106
    %p109 = scmp.ne.s32.totalorder %s94, %s108
    %p110 = scmp.eq.s32.totalorder %s21, 0
    %p111 = por %p109, %p110
    %s113 = sadd.s32 %s112, 1
    %p116 = scmp.eq.s32.totalorder %s15, 1
    %p117 = scmp.ne.s32.totalorder %s112, %s114
    %p118 = scmp.eq.s32.totalorder %s15, 0
    %p119 = por %p117, %p118
    %p120 = scmp.ne.s32.totalorder %s112, %s114
    %p121 = scmp.eq.s32.totalorder %s20, 1
    %p122 = por %p120, %p121
    %p123 = scmp.ne.s32.totalorder %s114, %s115
    %p124 = scmp.eq.s32.totalorder %s20, 0
    %p125 = por %p123, %p124
    %p126 = scmp.ne.s32.totalorder %s114, %s115
    %p127 = scmp.eq.s32.totalorder %s21, 1
    %p128 = por %p126, %p127
    %p130 = scmp.ne.s32.totalorder %s115, %s129
    %p131 = scmp.eq.s32.totalorder %s21, 0
    %p132 = por %p130, %p131
    %s134 = sadd.s32 %s133, 1
    %p137 = scmp.eq.s32.totalorder %s15, 1
    %p138 = scmp.ne.s32.totalorder %s133, %s135
    %p139 = scmp.eq.s32.totalorder %s15, 0
    %p140 = por %p138, %p139
    %p141 = scmp.ne.s32.totalorder %s133, %s135
    %p142 = scmp.eq.s32.totalorder %s20, 1
    %p143 = por %p141, %p142
    %p144 = scmp.ne.s32.totalorder %s135, %s136
    %p145 = scmp.eq.s32.totalorder %s20, 0
    %p146 = por %p144, %p145
    %p147 = scmp.ne.s32.totalorder %s135, %s136
    %p148 = scmp.eq.s32.totalorder %s21, 1
    %p149 = por %p147, %p148
    %p151 = scmp.ne.s32.totalorder %s136, %s150
    %p152 = scmp.eq.s32.totalorder %s21, 0
    %p153 = por %p151, %p152
    %s155 = sadd.s32 %s154, 1
    %p158 = scmp.eq.s32.totalorder %s15, 1
    %p159 = scmp.ne.s32.totalorder %s154, %s156
    %p160 = scmp.eq.s32.totalorder %s15, 0
    %p161 = por %p159, %p160
    %p162 = scmp.ne.s32.totalorder %s154, %s156
    %p163 = scmp.eq.s32.totalorder %s20, 1
    %p164 = por %p162, %p163
    %p165 = scmp.ne.s32.totalorder %s156, %s157
    %p166 = scmp.eq.s32.totalorder %s20, 0
    %p167 = por %p165, %p166
    %p168 = scmp.ne.s32.totalorder %s156, %s157
    %p169 = scmp.eq.s32.totalorder %s21, 1
    %p170 = por %p168, %p169
    %p172 = scmp.ne.s32.totalorder %s157, %s171
    %p173 = scmp.eq.s32.totalorder %s21, 0
    %p174 = por %p172, %p173
    %s175 = ssub.s32 %s15, %s22
    %p176 = scmp.eq.s32.totalorder %s175, 0
    %s178 = sadd.s32 %s177, 1
    %s179 = scalar_select %p176, %s177, %s178
    %p182 = pneg %p176
    %p183 = scmp.eq.s32.totalorder %s15, 1
    %p184 = por %p182, %p183
    %p185 = scmp.ne.s32.totalorder %s177, %s180
    %p186 = scmp.eq.s32.totalorder %s15, 0
    %p187 = por %p185, %p186
    %p188 = scmp.ne.s32.totalorder %s177, %s180
    %p189 = scmp.eq.s32.totalorder %s20, 1
    %p190 = por %p188, %p189
    %p191 = scmp.ne.s32.totalorder %s180, %s181
    %p192 = scmp.eq.s32.totalorder %s20, 0
    %p193 = por %p191, %p192
    %p194 = scmp.ne.s32.totalorder %s180, %s181
    %p195 = scmp.eq.s32.totalorder %s21, 1
    %p196 = por %p194, %p195
    %p198 = scmp.ne.s32.totalorder %s181, %s197
    %p199 = scmp.eq.s32.totalorder %s21, 0
    %p200 = por %p198, %p199
    %p201 = scmp.le.s32.totalorder 1, %s15
    %p202 = scmp.lt.s32.totalorder %s15, 3
    %p203 = pnand %p201, %p202
    %p204 = pneg %p203
    // Predicated region
    $region9: #{basic_block_transpose_modified_forward.1} parent=5 // pred_check
      _
    $region10: #{basic_block_transpose_modified_forward.1} parent=5 // pred_check_branch
      %206 = sbr.rel (%p203) target = $region12
    $region11: #{basic_block_transpose_modified_forward.1} parent=5 // pred_region
      %s207 = ssub.s32 %s15, 1
      // Predicated region
      $region13: #{basic_block_transpose_modified_forward.1} parent=11 // pred_check
        %p208 = pneg %p62
      $region14: #{basic_block_transpose_modified_forward.1} parent=11 // pred_check_branch
        %210 = sbr.rel (%p208) target = $region16
      $region15: #{basic_block_transpose_modified_forward.1} parent=11 // pred_region
        _
      $region16: #{basic_block_transpose_modified_forward.1} parent=11 // pred_fallthru
        _
      // Predicated region
      $region17: #{basic_block_transpose_modified_forward.1} parent=11 // pred_check
        %p211 = pneg %p83
      $region18: #{basic_block_transpose_modified_forward.1} parent=11 // pred_check_branch
        %213 = sbr.rel (%p211) target = $region20
      $region19: #{basic_block_transpose_modified_forward.1} parent=11 // pred_region
        _
      $region20: #{basic_block_transpose_modified_forward.1} parent=11 // pred_fallthru
        _
      // Predicated region
      $region21: #{basic_block_transpose_modified_forward.1} parent=11 // pred_check
        %p214 = pneg %p104
      $region22: #{basic_block_transpose_modified_forward.1} parent=11 // pred_check_branch
        %216 = sbr.rel (%p214) target = $region24
      $region23: #{basic_block_transpose_modified_forward.1} parent=11 // pred_region
        _
      $region24: #{basic_block_transpose_modified_forward.1} parent=11 // pred_fallthru
        _
      // Predicated region
      $region25: #{basic_block_transpose_modified_forward.1} parent=11 // pred_check
        %p217 = pneg %p125
      $region26: #{basic_block_transpose_modified_forward.1} parent=11 // pred_check_branch
        %219 = sbr.rel (%p217) target = $region28
      $region27: #{basic_block_transpose_modified_forward.1} parent=11 // pred_region
        _
      $region28: #{basic_block_transpose_modified_forward.1} parent=11 // pred_fallthru
        _
      // Predicated region
      $region29: #{basic_block_transpose_modified_forward.1} parent=11 // pred_check
        %p220 = pneg %p146
      $region30: #{basic_block_transpose_modified_forward.1} parent=11 // pred_check_branch
        %222 = sbr.rel (%p220) target = $region32
      $region31: #{basic_block_transpose_modified_forward.1} parent=11 // pred_region
        _
      $region32: #{basic_block_transpose_modified_forward.1} parent=11 // pred_fallthru
        _
      // Predicated region
      $region33: #{basic_block_transpose_modified_forward.1} parent=11 // pred_check
        %p223 = pneg %p167
      $region34: #{basic_block_transpose_modified_forward.1} parent=11 // pred_check_branch
        %225 = sbr.rel (%p223) target = $region36
      $region35: #{basic_block_transpose_modified_forward.1} parent=11 // pred_region
        _
      $region36: #{basic_block_transpose_modified_forward.1} parent=11 // pred_fallthru
        _
    $region12: #{basic_block_transpose_modified_forward.1} parent=5 // pred_fallthru
      _
    %p226 = scmp.lt.s32.totalorder %s15, 2
    // Predicated region
    $region37: #{basic_block_transpose_modified_forward.1} parent=5 // pred_check
      %p227 = pneg %p226
    $region38: #{basic_block_transpose_modified_forward.1} parent=5 // pred_check_branch
      %229 = sbr.rel (%p227) target = $region40
    $region39: #{basic_block_transpose_modified_forward.1} parent=5 // pred_region
      // Predicated region
      $region41: #{basic_block_transpose_modified_forward.1} parent=39 // pred_check
        %p230 = pneg %p35
      $region42: #{basic_block_transpose_modified_forward.1} parent=39 // pred_check_branch
        %232 = sbr.rel (%p230) target = $region44
      $region43: #{basic_block_transpose_modified_forward.1} parent=39 // pred_region
        %p233 = scmp.lt.s32.totalorder %s15, 1
        %s234 = scalar_select %p233, %s15, 1
        %s235 = smul.addr %s234, 2
        %s236 = smul.addr %s235, 4
        %s237 = scalar_lea.vmem %s0, %s236
      $region44: #{basic_block_transpose_modified_forward.1} parent=39 // pred_fallthru
        _
    $region40: #{basic_block_transpose_modified_forward.1} parent=5 // pred_fallthru
      _
    %p238 = scmp.le.s32.totalorder 1, %s15
    %p239 = scmp.lt.s32.totalorder %s15, 3
    %p240 = pnand %p238, %p239
    %p241 = pneg %p240
    // Predicated region
    $region45: #{basic_block_transpose_modified_forward.1} parent=5 // pred_check
      _
    $region46: #{basic_block_transpose_modified_forward.1} parent=5 // pred_check_branch
      %243 = sbr.rel (%p240) target = $region48
    $region47: #{basic_block_transpose_modified_forward.1} parent=5 // pred_region
      %s244 = ssub.s32 %s15, 1
      %p245 = scmp.lt.s32.totalorder %s20, 1
      %s246 = scalar_select %p245, %s20, 1
      %s247 = smul.addr %s246, 2
      %s248 = smul.addr %s247, 4
      %s249 = scalar_lea.vmem %s0, %s248
      %p250 = pneg %p41
      %p251 = pneg %p38
      %p252 = pneg %p62
      %p253 = pneg %p59
      %p254 = pneg %p83
      %p255 = pneg %p80
      %p256 = pneg %p104
      %p257 = pneg %p101
      %p258 = pneg %p125
      %p259 = pneg %p122
      %p260 = pneg %p146
      %p261 = pneg %p143
      %p262 = pneg %p167
      %p263 = pneg %p164
      %p264 = pneg %p193
      %p265 = pneg %p190
      %p266 = scmp.lt.s32.totalorder %s20, 1
      %s267 = scalar_select %p266, %s20, 1
      %s268 = smul.addr %s267, 2
      %s269 = smul.addr %s268, 8
      %s270 = scalar_lea.vmem %s7, %s269
      %p271 = scmp.lt.s32.totalorder %s20, 1
      %s272 = scalar_select %p271, %s20, 1
      %s273 = smul.addr %s272, 2
      %s274 = smul.addr %s273, 4
      %s275 = scalar_lea.vmem %s0, %s274
      %p276 = scmp.lt.s32.totalorder %s20, 1
      %s277 = scalar_select %p276, %s20, 1
      %s278 = smul.addr %s277, 2
      %s279 = smul.addr %s278, 8
      %s280 = scalar_lea.vmem %s7, %s279
      %v282 = vld [vmem:[%s275] sm:$0xff]
      %v283 = vld [vmem:[%s2] sm:$0xf]
      %285 = vset.pattern.permute.xlu0 0
      %286 = vperm.xlu0 %285, %v283
      %v287 = vpop.permute.xlu0 %286
      %v289 = vunpack.c.l.s4 839922192
      %v290 = vunpack.c.0.s8 %v289
      %v291 = vlaneseq
      %v292 = vshrl.u32 %v291, 7
      %v293 = vsub.s32 %v290, %v292
      %v294 = vrot.slane %v287, %v293
      %v296 = vadd.f32 %v282, %v294
      %vm297 = vcmp.gt.f32.partialorder %v296, 0.0
      %v298 = vld [vmem:[%s3] sm:$0xf]
      %300 = vset.pattern.permute.xlu0 0
      %301 = vperm.xlu0 %300, %v298
      %v302 = vpop.permute.xlu0 %301
      %v304 = vunpack.c.l.s4 839922192
      %v305 = vunpack.c.0.s8 %v304
      %v306 = vlaneseq
      %v307 = vshrl.u32 %v306, 7
      %v308 = vsub.s32 %v305, %v307
      %v309 = vrot.slane %v302, %v308
      %v311 = vmul.f32 %v296, %v309
      %v312 = vsel %vm297, %v296, %v311
      %v313 = vld [vmem:[%s4] sm:$0xf]
      %315 = vset.pattern.permute.xlu0 0
      %316 = vperm.xlu0 %315, %v313
      %v317 = vpop.permute.xlu0 %316
      %v319 = vunpack.c.l.s4 839922192
      %v320 = vunpack.c.0.s8 %v319
      %v321 = vlaneseq
      %v322 = vshrl.u32 %v321, 7
      %v323 = vsub.s32 %v320, %v322
      %v324 = vrot.slane %v317, %v323
      %v326 = vadd.f32 %v312, %v324
      %vm327 = vcmp.gt.f32.partialorder %v326, 0.0
      %vm328 = vcmp.lt.f32.partialorder %v326, 0.0
      %v329 = vsel %vm328, -1.0, 0.0
      %v330 = vsel %vm327, 1.0, %v329
      %v332 = vcombine.high %v330, %v330
      %v334 = vpack.c.bf16 %v330, %v330
      %v335 = vpack.c.bf16 %v332, %v332
      %vm336 = vcmask 1041408
      %v339 = vsel %vm336, %v334, 0
      %v341 = vsel %vm336, %v335, 0
      %342 = vst [vmem:[#allocation2] sm:$0xf] 0
      %343 = vst [vmem:[#allocation2 + $0xc] sm:$0xf] 0
      %v346 = vunpack.c.l.b16 %v339
      %v347 = vunpack.c.l.b16 %v341
      %v348 = vpack.c.b16 %v347, %v346
      %350 = vst [vmem:[#allocation2 + $0x4] sm:$0xff] %v348
      %v351 = vld [vmem:[%s5] sm:$0x3]
      %v352 = vld [vmem:[#allocation2] sm:$0xff]
      %v353 = vld [vmem:[#allocation2 + $0x8] sm:$0xf]
      %v356 = vunpack.c.l.s4 1966171168
      %v357 = vunpack.c.0.s8 %v356
      %v358 = vlaneseq
      %v359 = vshrl.u32 %v358, 7
      %v360 = vsub.s32 %v357, %v359
      %v361 = vrot.slane %v351, %v360
      %v362 = vcombine.high %v361, %v361
      %v364 = vunpack.c.l.s4 1966171168
      %v365 = vunpack.c.0.s8 %v364
      %v366 = vlaneseq
      %v367 = vshrl.u32 %v366, 7
      %v368 = vsub.s32 %v365, %v367
      %v369 = vrot.slane %v361, %v368
      %v371 = vunpack.c.l.s4 1966171168
      %v372 = vunpack.c.0.s8 %v371
      %v373 = vlaneseq
      %v374 = vshrl.u32 %v373, 7
      %v375 = vsub.s32 %v372, %v374
      %v376 = vrot.slane %v362, %v375
      %v378 = vpack.i.b16 %v369, %v369
      %v380 = vlaneseq
      %v381 = vshrl.u32 %v380, 7
      %v382 = vsub.s32 0, %v381
      %v383 = vrot.slane %v378, %v382
      %v385 = vpack.i.b16 %v376, %v376
      %v387 = vlaneseq
      %v388 = vshrl.u32 %v387, 7
      %v389 = vsub.s32 0, %v388
      %v390 = vrot.slane %v385, %v389
      %v393 = vunpack.c.l.b16 %v383
      %v394 = vunpack.c.l.b16 %v390
      %v395 = vpack.c.b16 %v394, %v393
      %396 = vrot.lane.b32.xlu0 %v395, 111
      %v397 = vpop.permute.xlu0 %396
      %v398 = vrot.slane %v397, 4
      %vm399 = vcmask 908288
      %v400 = vsel %vm399, %v398, %v397
      %v403 = vmul.bf16 %v352, %v400
      %v404 = vmul.bf16 %v353, %v398
      %v405 = vld [vmem:[%s1] sm:$0xf]
      %s406 = scalar_lea.vmem %s1, 4
      %v407 = vld [vmem:[%s406] sm:$0xf]
      %v410 = vunpack.c.l.b16 %v352
      %v411 = vunpack.c.h.b16 %v352
      %v412 = vunpack.c.l.b16 %v353
      %v413 = vpack.c.b16 %v410, %v410
      %v414 = vpack.c.b16 %v411, %v411
      %v415 = vpack.c.b16 %v412, %v412
      %416 = vrot.lane.b32.xlu0 %v413, 16
      %v417 = vpop.permute.xlu0 %416
      %418 = vrot.lane.b32.xlu0 %v414, 16
      %v419 = vpop.permute.xlu0 %418
      %420 = vrot.lane.b32.xlu0 %v415, 16
      %v421 = vpop.permute.xlu0 %420
      %vm422 = vcmask 130048
      %v423 = vsel %vm422, %v417, %v419
      %v424 = vsel %vm422, %v419, %v421
      %vm425 = vcmask 64512
      %v427 = vsel %vm425, %v407, 0
      %vm429 = vcmask 1043456
      %v431 = vsel %vm429, %v423, 0
      %v434 = vsel %vm429, %v424, 0
      %436 = vmatprep.subr.bf16.mxu0 %v434
      %437 = vmatpush1.bf16.msra.mxu0 %v431
      %438 = vmatprep.subr.bf16.mxu0 0
      %439 = vmatpush1.bf16.msra.mxu0 0
      %440 = vmatprep.subr.bf16.mxu0 0
      %441 = vmatpush1.bf16.msra.mxu0 0
      %442 = vmatprep.subr.bf16.mxu0 0
      %443 = vmatpush1.bf16.msra.mxu0 0
      %444 = vmatprep.subr.bf16.mxu0 0
      %445 = vmatpush1.bf16.msra.mxu0 0
      %446 = vmatprep.subr.bf16.mxu0 0
      %447 = vmatpush1.bf16.msra.mxu0 0
      %448 = vmatprep.subr.bf16.mxu0 0
      %449 = vmatpush1.bf16.msra.mxu0 0
      %450 = vmatprep.subr.bf16.mxu0 0
      %451 = vmatpush1.bf16.msra.mxu0 0
      %452 = vmatprep.subr.bf16.mxu0 0
      %453 = vmatpush1.bf16.msra.mxu0 0
      %454 = vmatprep.subr.bf16.mxu0 0
      %455 = vmatpush1.bf16.msra.mxu0 0
      %456 = vmatprep.subr.bf16.mxu0 0
      %457 = vmatpush1.bf16.msra.mxu0 0
      %458 = vmatprep.subr.bf16.mxu0 0
      %459 = vmatpush1.bf16.msra.mxu0 0
      %460 = vmatprep.subr.bf16.mxu0 0
      %461 = vmatpush1.bf16.msra.mxu0 0
      %462 = vmatprep.subr.bf16.mxu0 0
      %463 = vmatpush1.bf16.msra.mxu0 0
      %464 = vmatprep.subr.bf16.mxu0 0
      %465 = vmatpush1.bf16.msra.mxu0 0
      %466 = vmatprep.subr.bf16.mxu0 0
      %467 = vmatpush1.bf16.msra.mxu0 0
      %468 = vmatprep.mubr.bf16.mxu0 0
      %469 = vmatmul.mubr.bf16.gmra.mrb[0].mxu0 %v427
      %v470 = vpop.f32.mrb[0].mxu0
      %v471 = vadd.f32 0.0, %v470
      %v472 = vpop.f32.mrb[0].mxu0
      %v473 = vadd.f32 0.0, %v472
      %v474 = vpop.f32.mrb[0].mxu0
      %v475 = vpop.f32.mrb[0].mxu0
      %476 = vdwg.mxu0
      %v479 = vunpack.c.l.b16 %v403
      %v480 = vunpack.c.h.b16 %v403
      %v481 = vunpack.c.l.b16 %v404
      %v482 = vpack.c.b16 %v479, %v479
      %v483 = vpack.c.b16 %v480, %v480
      %v484 = vpack.c.b16 %v481, %v481
      %485 = vrot.lane.b32.xlu0 %v482, 17
      %v486 = vpop.permute.xlu0 %485
      %487 = vrot.lane.b32.xlu0 %v483, 17
      %v488 = vpop.permute.xlu0 %487
      %489 = vrot.lane.b32.xlu0 %v484, 17
      %v490 = vpop.permute.xlu0 %489
      %vm491 = vcmask 138240
      %v492 = vsel %vm491, %v486, %v488
      %v493 = vsel %vm491, %v488, %v490
      %v495 = vsel %vm425, %v405, 0
      %v498 = vsel %vm429, %v492, 0
      %v501 = vsel %vm429, %v493, 0
      %503 = vmatprep.subr.bf16.mxu0 %v501
      %504 = vmatpush1.bf16.msra.mxu0 %v498
      %505 = vmatprep.subr.bf16.mxu0 0
      %506 = vmatpush1.bf16.msra.mxu0 0
      %507 = vmatprep.subr.bf16.mxu0 0
      %508 = vmatpush1.bf16.msra.mxu0 0
      %509 = vmatprep.subr.bf16.mxu0 0
      %510 = vmatpush1.bf16.msra.mxu0 0
      %511 = vmatprep.subr.bf16.mxu0 0
      %512 = vmatpush1.bf16.msra.mxu0 0
      %513 = vmatprep.subr.bf16.mxu0 0
      %514 = vmatpush1.bf16.msra.mxu0 0
      %515 = vmatprep.subr.bf16.mxu0 0
      %516 = vmatpush1.bf16.msra.mxu0 0
      %517 = vmatprep.subr.bf16.mxu0 0
      %518 = vmatpush1.bf16.msra.mxu0 0
      %519 = vmatprep.subr.bf16.mxu0 0
      %520 = vmatpush1.bf16.msra.mxu0 0
      %521 = vmatprep.subr.bf16.mxu0 0
      %522 = vmatpush1.bf16.msra.mxu0 0
      %523 = vmatprep.subr.bf16.mxu0 0
      %524 = vmatpush1.bf16.msra.mxu0 0
      %525 = vmatprep.subr.bf16.mxu0 0
      %526 = vmatpush1.bf16.msra.mxu0 0
      %527 = vmatprep.subr.bf16.mxu0 0
      %528 = vmatpush1.bf16.msra.mxu0 0
      %529 = vmatprep.subr.bf16.mxu0 0
      %530 = vmatpush1.bf16.msra.mxu0 0
      %531 = vmatprep.subr.bf16.mxu0 0
      %532 = vmatpush1.bf16.msra.mxu0 0
      %533 = vmatprep.subr.bf16.mxu0 0
      %534 = vmatpush1.bf16.msra.mxu0 0
      %535 = vmatprep.mubr.bf16.mxu0 0
      %536 = vmatmul.mubr.bf16.gmra.mrb[0].mxu0 %v495
      %v537 = vpop.f32.mrb[0].mxu0
      %v538 = vadd.f32 %v471, %v537
      %v539 = vpop.f32.mrb[0].mxu0
      %v540 = vadd.f32 %v473, %v539
      %v541 = vpop.f32.mrb[0].mxu0
      %v542 = vpop.f32.mrb[0].mxu0
      %543 = vdwg.mxu0
      %v544 = vshrl.u32 %v369, 16
      %v545 = vpack.i.b16 %v544, %v544
      %v547 = vlaneseq
      %v548 = vshrl.u32 %v547, 7
      %v549 = vsub.s32 0, %v548
      %v550 = vrot.slane %v545, %v549
      %v551 = vshrl.u32 %v376, 16
      %v552 = vpack.i.b16 %v551, %v551
      %v554 = vlaneseq
      %v555 = vshrl.u32 %v554, 7
      %v556 = vsub.s32 0, %v555
      %v557 = vrot.slane %v552, %v556
      %v560 = vunpack.c.l.b16 %v550
      %v561 = vunpack.c.l.b16 %v557
      %v562 = vpack.c.b16 %v561, %v560
      %563 = vrot.lane.b32.xlu0 %v562, 113
      %v564 = vpop.permute.xlu0 %563
      %v565 = vrot.slane %v564, 4
      %vm566 = vcmask 924672
      %v567 = vsel %vm566, %v565, %v564
      %v570 = vmul.bf16 %v352, %v567
      %v571 = vmul.bf16 %v353, %v565
      %s572 = scalar_lea.vmem %s1, 8
      %v573 = vld [vmem:[%s572] sm:$0xf]
      %v576 = vunpack.c.l.b16 %v570
      %v577 = vunpack.c.h.b16 %v570
      %v578 = vunpack.c.l.b16 %v571
      %v579 = vpack.c.b16 %v576, %v576
      %v580 = vpack.c.b16 %v577, %v577
      %v581 = vpack.c.b16 %v578, %v578
      %582 = vrot.lane.b32.xlu0 %v579, 15
      %v583 = vpop.permute.xlu0 %582
      %584 = vrot.lane.b32.xlu0 %v580, 15
      %v585 = vpop.permute.xlu0 %584
      %586 = vrot.lane.b32.xlu0 %v581, 15
      %v587 = vpop.permute.xlu0 %586
      %vm588 = vcmask 121856
      %v589 = vsel %vm588, %v583, %v585
      %v590 = vsel %vm588, %v585, %v587
      %v592 = vsel %vm425, %v573, 0
      %v595 = vsel %vm429, %v589, 0
      %v598 = vsel %vm429, %v590, 0
      %600 = vmatprep.subr.bf16.mxu0 %v598
      %601 = vmatpush1.bf16.msra.mxu0 %v595
      %602 = vmatprep.subr.bf16.mxu0 0
      %603 = vmatpush1.bf16.msra.mxu0 0
      %604 = vmatprep.subr.bf16.mxu0 0
      %605 = vmatpush1.bf16.msra.mxu0 0
      %606 = vmatprep.subr.bf16.mxu0 0
      %607 = vmatpush1.bf16.msra.mxu0 0
      %608 = vmatprep.subr.bf16.mxu0 0
      %609 = vmatpush1.bf16.msra.mxu0 0
      %610 = vmatprep.subr.bf16.mxu0 0
      %611 = vmatpush1.bf16.msra.mxu0 0
      %612 = vmatprep.subr.bf16.mxu0 0
      %613 = vmatpush1.bf16.msra.mxu0 0
      %614 = vmatprep.subr.bf16.mxu0 0
      %615 = vmatpush1.bf16.msra.mxu0 0
      %616 = vmatprep.subr.bf16.mxu0 0
      %617 = vmatpush1.bf16.msra.mxu0 0
      %618 = vmatprep.subr.bf16.mxu0 0
      %619 = vmatpush1.bf16.msra.mxu0 0
      %620 = vmatprep.subr.bf16.mxu0 0
      %621 = vmatpush1.bf16.msra.mxu0 0
      %622 = vmatprep.subr.bf16.mxu0 0
      %623 = vmatpush1.bf16.msra.mxu0 0
      %624 = vmatprep.subr.bf16.mxu0 0
      %625 = vmatpush1.bf16.msra.mxu0 0
      %626 = vmatprep.subr.bf16.mxu0 0
      %627 = vmatpush1.bf16.msra.mxu0 0
      %628 = vmatprep.subr.bf16.mxu0 0
      %629 = vmatpush1.bf16.msra.mxu0 0
      %630 = vmatprep.subr.bf16.mxu0 0
      %631 = vmatpush1.bf16.msra.mxu0 0
      %632 = vmatprep.mubr.bf16.mxu0 0
      %633 = vmatmul.mubr.bf16.gmra.mrb[0].mxu0 %v592
      %v634 = vpop.f32.mrb[0].mxu0
      %v635 = vadd.f32 0.0, %v634
      %v636 = vpop.f32.mrb[0].mxu0
      %v637 = vadd.f32 0.0, %v636
      %v638 = vpop.f32.mrb[0].mxu0
      %v639 = vpop.f32.mrb[0].mxu0
      %640 = vdwg.mxu0
      %v641 = vadd.f32 %v538, %v635
      %v642 = vadd.f32 %v540, %v637
      %v643 = vld [vmem:[#allocation2] sm:$0xff]
      %v644 = vld [vmem:[#allocation2 + $0x8] sm:$0xf]
      %645 = vrot.lane.b32.xlu0 %v395, 127
      %v646 = vpop.permute.xlu0 %645
      %v647 = vrot.slane %v646, 4
      %vm648 = vcmask 1039360
      %v649 = vsel %vm648, %v647, %v646
      %v652 = vmul.bf16 %v643, %v649
      %v653 = vmul.bf16 %v644, %v647
      %s654 = scalar_lea.vmem %s1, 12
      %v655 = vld [vmem:[%s654] sm:$0xf]
      %v658 = vunpack.c.l.b16 %v652
      %v659 = vunpack.c.h.b16 %v652
      %v660 = vunpack.c.l.b16 %v653
      %v661 = vpack.c.b16 %v658, %v658
      %v662 = vpack.c.b16 %v659, %v659
      %v663 = vpack.c.b16 %v660, %v660
      %664 = vrot.lane.b32.xlu0 %v661, 1
      %v665 = vpop.permute.xlu0 %664
      %666 = vrot.lane.b32.xlu0 %v662, 1
      %v667 = vpop.permute.xlu0 %666
      %668 = vrot.lane.b32.xlu0 %v663, 1
      %v669 = vpop.permute.xlu0 %668
      %vm670 = vcmask 7168
      %v671 = vsel %vm670, %v665, %v667
      %v672 = vsel %vm670, %v667, %v669
      %v674 = vsel %vm425, %v655, 0
      %v677 = vsel %vm429, %v671, 0
      %v680 = vsel %vm429, %v672, 0
      %682 = vmatprep.subr.bf16.mxu0 %v680
      %683 = vmatpush1.bf16.msra.mxu0 %v677
      %684 = vmatprep.subr.bf16.mxu0 0
      %685 = vmatpush1.bf16.msra.mxu0 0
      %686 = vmatprep.subr.bf16.mxu0 0
      %687 = vmatpush1.bf16.msra.mxu0 0
      %688 = vmatprep.subr.bf16.mxu0 0
      %689 = vmatpush1.bf16.msra.mxu0 0
      %690 = vmatprep.subr.bf16.mxu0 0
      %691 = vmatpush1.bf16.msra.mxu0 0
      %692 = vmatprep.subr.bf16.mxu0 0
      %693 = vmatpush1.bf16.msra.mxu0 0
      %694 = vmatprep.subr.bf16.mxu0 0
      %695 = vmatpush1.bf16.msra.mxu0 0
      %696 = vmatprep.subr.bf16.mxu0 0
      %697 = vmatpush1.bf16.msra.mxu0 0
      %698 = vmatprep.subr.bf16.mxu0 0
      %699 = vmatpush1.bf16.msra.mxu0 0
      %700 = vmatprep.subr.bf16.mxu0 0
      %701 = vmatpush1.bf16.msra.mxu0 0
      %702 = vmatprep.subr.bf16.mxu0 0
      %703 = vmatpush1.bf16.msra.mxu0 0
      %704 = vmatprep.subr.bf16.mxu0 0
      %705 = vmatpush1.bf16.msra.mxu0 0
      %706 = vmatprep.subr.bf16.mxu0 0
      %707 = vmatpush1.bf16.msra.mxu0 0
      %708 = vmatprep.subr.bf16.mxu0 0
      %709 = vmatpush1.bf16.msra.mxu0 0
      %710 = vmatprep.subr.bf16.mxu0 0
      %711 = vmatpush1.bf16.msra.mxu0 0
      %712 = vmatprep.subr.bf16.mxu0 0
      %713 = vmatpush1.bf16.msra.mxu0 0
      %714 = vmatprep.mubr.bf16.mxu0 0
      %715 = vmatmul.mubr.bf16.gmra.mrb[0].mxu0 %v674
      %v716 = vpop.f32.mrb[0].mxu0
      %v717 = vadd.f32 0.0, %v716
      %v718 = vpop.f32.mrb[0].mxu0
      %v719 = vadd.f32 0.0, %v718
      %v720 = vpop.f32.mrb[0].mxu0
      %v721 = vpop.f32.mrb[0].mxu0
      %722 = vdwg.mxu0
      %v723 = vadd.f32 %v641, %v717
      %v724 = vadd.f32 %v642, %v719
      %v725 = vld [vmem:[#allocation2 + $0x4] sm:$0xff]
      %s726 = scalar_lea.vmem %s1, 16
      %v727 = vld [vmem:[%s726] sm:$0xf]
      %v729 = vunpack.c.l.b16 %v725
      %v730 = vunpack.c.h.b16 %v725
      %v731 = vpack.c.b16 %v729, %v729
      %v732 = vpack.c.b16 %v730, %v730
      %v734 = vsel %vm425, %v727, 0
      %v737 = vsel %vm429, %v731, 0
      %v740 = vsel %vm429, %v732, 0
      %742 = vmatprep.subr.bf16.mxu0 %v740
      %743 = vmatpush1.bf16.msra.mxu0 %v737
      %744 = vmatprep.subr.bf16.mxu0 0
      %745 = vmatpush1.bf16.msra.mxu0 0
      %746 = vmatprep.subr.bf16.mxu0 0
      %747 = vmatpush1.bf16.msra.mxu0 0
      %748 = vmatprep.subr.bf16.mxu0 0
      %749 = vmatpush1.bf16.msra.mxu0 0
      %750 = vmatprep.subr.bf16.mxu0 0
      %751 = vmatpush1.bf16.msra.mxu0 0
      %752 = vmatprep.subr.bf16.mxu0 0
      %753 = vmatpush1.bf16.msra.mxu0 0
      %754 = vmatprep.subr.bf16.mxu0 0
      %755 = vmatpush1.bf16.msra.mxu0 0
      %756 = vmatprep.subr.bf16.mxu0 0
      %757 = vmatpush1.bf16.msra.mxu0 0
      %758 = vmatprep.subr.bf16.mxu0 0
      %759 = vmatpush1.bf16.msra.mxu0 0
      %760 = vmatprep.subr.bf16.mxu0 0
      %761 = vmatpush1.bf16.msra.mxu0 0
      %762 = vmatprep.subr.bf16.mxu0 0
      %763 = vmatpush1.bf16.msra.mxu0 0
      %764 = vmatprep.subr.bf16.mxu0 0
      %765 = vmatpush1.bf16.msra.mxu0 0
      %766 = vmatprep.subr.bf16.mxu0 0
      %767 = vmatpush1.bf16.msra.mxu0 0
      %768 = vmatprep.subr.bf16.mxu0 0
      %769 = vmatpush1.bf16.msra.mxu0 0
      %770 = vmatprep.subr.bf16.mxu0 0
      %771 = vmatpush1.bf16.msra.mxu0 0
      %772 = vmatprep.subr.bf16.mxu0 0
      %773 = vmatpush1.bf16.msra.mxu0 0
      %774 = vmatprep.mubr.bf16.mxu0 0
      %775 = vmatmul.mubr.bf16.gmra.mrb[0].mxu0 %v734
      %v776 = vpop.f32.mrb[0].mxu0
      %v777 = vadd.f32 0.0, %v776
      %v778 = vpop.f32.mrb[0].mxu0
      %v779 = vadd.f32 0.0, %v778
      %v780 = vpop.f32.mrb[0].mxu0
      %v781 = vpop.f32.mrb[0].mxu0
      %782 = vdwg.mxu0
      %v783 = vadd.f32 %v723, %v777
      %v784 = vadd.f32 %v724, %v779
      %v785 = vld [vmem:[#allocation2 + $0x4] sm:$0xff]
      %v786 = vld [vmem:[#allocation2 + $0xc] sm:$0xf]
      %787 = vrot.lane.b32.xlu0 %v562, 1
      %v788 = vpop.permute.xlu0 %787
      %v789 = vrot.slane %v788, 4
      %v790 = vsel %vm670, %v789, %v788
      %v793 = vmul.bf16 %v785, %v790
      %v794 = vmul.bf16 %v786, %v789
      %s795 = scalar_lea.vmem %s1, 20
      %v796 = vld [vmem:[%s795] sm:$0xf]
      %v799 = vunpack.c.l.b16 %v793
      %v800 = vunpack.c.h.b16 %v793
      %v801 = vunpack.c.l.b16 %v794
      %v802 = vpack.c.b16 %v799, %v799
      %v803 = vpack.c.b16 %v800, %v800
      %v804 = vpack.c.b16 %v801, %v801
      %805 = vrot.lane.b32.xlu0 %v802, 127
      %v806 = vpop.permute.xlu0 %805
      %807 = vrot.lane.b32.xlu0 %v803, 127
      %v808 = vpop.permute.xlu0 %807
      %809 = vrot.lane.b32.xlu0 %v804, 127
      %v810 = vpop.permute.xlu0 %809
      %v811 = vsel %vm648, %v806, %v808
      %v812 = vsel %vm648, %v808, %v810
      %v814 = vsel %vm425, %v796, 0
      %v817 = vsel %vm429, %v811, 0
      %v820 = vsel %vm429, %v812, 0
      %822 = vmatprep.subr.bf16.mxu0 %v820
      %823 = vmatpush1.bf16.msra.mxu0 %v817
      %824 = vmatprep.subr.bf16.mxu0 0
      %825 = vmatpush1.bf16.msra.mxu0 0
      %826 = vmatprep.subr.bf16.mxu0 0
      %827 = vmatpush1.bf16.msra.mxu0 0
      %828 = vmatprep.subr.bf16.mxu0 0
      %829 = vmatpush1.bf16.msra.mxu0 0
      %830 = vmatprep.subr.bf16.mxu0 0
      %831 = vmatpush1.bf16.msra.mxu0 0
      %832 = vmatprep.subr.bf16.mxu0 0
      %833 = vmatpush1.bf16.msra.mxu0 0
      %834 = vmatprep.subr.bf16.mxu0 0
      %835 = vmatpush1.bf16.msra.mxu0 0
      %836 = vmatprep.subr.bf16.mxu0 0
      %837 = vmatpush1.bf16.msra.mxu0 0
      %838 = vmatprep.subr.bf16.mxu0 0
      %839 = vmatpush1.bf16.msra.mxu0 0
      %840 = vmatprep.subr.bf16.mxu0 0
      %841 = vmatpush1.bf16.msra.mxu0 0
      %842 = vmatprep.subr.bf16.mxu0 0
      %843 = vmatpush1.bf16.msra.mxu0 0
      %844 = vmatprep.subr.bf16.mxu0 0
      %845 = vmatpush1.bf16.msra.mxu0 0
      %846 = vmatprep.subr.bf16.mxu0 0
      %847 = vmatpush1.bf16.msra.mxu0 0
      %848 = vmatprep.subr.bf16.mxu0 0
      %849 = vmatpush1.bf16.msra.mxu0 0
      %850 = vmatprep.subr.bf16.mxu0 0
      %851 = vmatpush1.bf16.msra.mxu0 0
      %852 = vmatprep.subr.bf16.mxu0 0
      %853 = vmatpush1.bf16.msra.mxu0 0
      %854 = vmatprep.mubr.bf16.mxu0 0
      %855 = vmatmul.mubr.bf16.gmra.mrb[0].mxu0 %v814
      %v856 = vpop.f32.mrb[0].mxu0
      %v857 = vadd.f32 0.0, %v856
      %v858 = vpop.f32.mrb[0].mxu0
      %v859 = vadd.f32 0.0, %v858
      %v860 = vpop.f32.mrb[0].mxu0
      %v861 = vpop.f32.mrb[0].mxu0
      %862 = vdwg.mxu0
      %v863 = vadd.f32 %v783, %v857
      %v864 = vadd.f32 %v784, %v859
      %865 = vrot.lane.b32.xlu0 %v395, 15
      %v866 = vpop.permute.xlu0 %865
      %v867 = vrot.slane %v866, 4
      %v868 = vsel %vm588, %v867, %v866
      %v871 = vmul.bf16 %v785, %v868
      %v872 = vmul.bf16 %v786, %v867
      %s873 = scalar_lea.vmem %s1, 24
      %v874 = vld [vmem:[%s873] sm:$0xf]
      %v877 = vunpack.c.l.b16 %v871
      %v878 = vunpack.c.h.b16 %v871
      %v879 = vunpack.c.l.b16 %v872
      %v880 = vpack.c.b16 %v877, %v877
      %v881 = vpack.c.b16 %v878, %v878
      %v882 = vpack.c.b16 %v879, %v879
      %883 = vrot.lane.b32.xlu0 %v880, 113
      %v884 = vpop.permute.xlu0 %883
      %885 = vrot.lane.b32.xlu0 %v881, 113
      %v886 = vpop.permute.xlu0 %885
      %887 = vrot.lane.b32.xlu0 %v882, 113
      %v888 = vpop.permute.xlu0 %887
      %v889 = vsel %vm566, %v884, %v886
      %v890 = vsel %vm566, %v886, %v888
      %v892 = vsel %vm425, %v874, 0
      %v895 = vsel %vm429, %v889, 0
      %v898 = vsel %vm429, %v890, 0
      %900 = vmatprep.subr.bf16.mxu0 %v898
      %901 = vmatpush1.bf16.msra.mxu0 %v895
      %902 = vmatprep.subr.bf16.mxu0 0
      %903 = vmatpush1.bf16.msra.mxu0 0
      %904 = vmatprep.subr.bf16.mxu0 0
      %905 = vmatpush1.bf16.msra.mxu0 0
      %906 = vmatprep.subr.bf16.mxu0 0
      %907 = vmatpush1.bf16.msra.mxu0 0
      %908 = vmatprep.subr.bf16.mxu0 0
      %909 = vmatpush1.bf16.msra.mxu0 0
      %910 = vmatprep.subr.bf16.mxu0 0
      %911 = vmatpush1.bf16.msra.mxu0 0
      %912 = vmatprep.subr.bf16.mxu0 0
      %913 = vmatpush1.bf16.msra.mxu0 0
      %914 = vmatprep.subr.bf16.mxu0 0
      %915 = vmatpush1.bf16.msra.mxu0 0
      %916 = vmatprep.subr.bf16.mxu0 0
      %917 = vmatpush1.bf16.msra.mxu0 0
      %918 = vmatprep.subr.bf16.mxu0 0
      %919 = vmatpush1.bf16.msra.mxu0 0
      %920 = vmatprep.subr.bf16.mxu0 0
      %921 = vmatpush1.bf16.msra.mxu0 0
      %922 = vmatprep.subr.bf16.mxu0 0
      %923 = vmatpush1.bf16.msra.mxu0 0
      %924 = vmatprep.subr.bf16.mxu0 0
      %925 = vmatpush1.bf16.msra.mxu0 0
      %926 = vmatprep.subr.bf16.mxu0 0
      %927 = vmatpush1.bf16.msra.mxu0 0
      %928 = vmatprep.subr.bf16.mxu0 0
      %929 = vmatpush1.bf16.msra.mxu0 0
      %930 = vmatprep.subr.bf16.mxu0 0
      %931 = vmatpush1.bf16.msra.mxu0 0
      %932 = vmatprep.mubr.bf16.mxu0 0
      %933 = vmatmul.mubr.bf16.gmra.mrb[0].mxu0 %v892
      %v934 = vpop.f32.mrb[0].mxu0
      %v935 = vadd.f32 0.0, %v934
      %v936 = vpop.f32.mrb[0].mxu0
      %v937 = vadd.f32 0.0, %v936
      %v938 = vpop.f32.mrb[0].mxu0
      %v939 = vpop.f32.mrb[0].mxu0
      %940 = vdwg.mxu0
      %v941 = vadd.f32 %v863, %v935
      %v942 = vadd.f32 %v864, %v937
      %s943 = scalar_lea.vmem %s1, 28
      %v944 = vld [vmem:[%s943] sm:$0xf]
      %v947 = vunpack.c.l.b16 %v785
      %v948 = vunpack.c.h.b16 %v785
      %v949 = vunpack.c.l.b16 %v786
      %v950 = vpack.c.b16 %v947, %v947
      %v951 = vpack.c.b16 %v948, %v948
      %v952 = vpack.c.b16 %v949, %v949
      %953 = vrot.lane.b32.xlu0 %v950, 112
      %v954 = vpop.permute.xlu0 %953
      %955 = vrot.lane.b32.xlu0 %v951, 112
      %v956 = vpop.permute.xlu0 %955
      %957 = vrot.lane.b32.xlu0 %v952, 112
      %v958 = vpop.permute.xlu0 %957
      %vm959 = vcmask 916480
      %v960 = vsel %vm959, %v954, %v956
      %v961 = vsel %vm959, %v956, %v958
      %v963 = vsel %vm425, %v944, 0
      %v966 = vsel %vm429, %v960, 0
      %v969 = vsel %vm429, %v961, 0
      %971 = vmatprep.subr.bf16.mxu0 %v969
      %972 = vmatpush1.bf16.msra.mxu0 %v966
      %973 = vmatprep.subr.bf16.mxu0 0
      %974 = vmatpush1.bf16.msra.mxu0 0
      %975 = vmatprep.subr.bf16.mxu0 0
      %976 = vmatpush1.bf16.msra.mxu0 0
      %977 = vmatprep.subr.bf16.mxu0 0
      %978 = vmatpush1.bf16.msra.mxu0 0
      %979 = vmatprep.subr.bf16.mxu0 0
      %980 = vmatpush1.bf16.msra.mxu0 0
      %981 = vmatprep.subr.bf16.mxu0 0
      %982 = vmatpush1.bf16.msra.mxu0 0
      %983 = vmatprep.subr.bf16.mxu0 0
      %984 = vmatpush1.bf16.msra.mxu0 0
      %985 = vmatprep.subr.bf16.mxu0 0
      %986 = vmatpush1.bf16.msra.mxu0 0
      %987 = vmatprep.subr.bf16.mxu0 0
      %988 = vmatpush1.bf16.msra.mxu0 0
      %989 = vmatprep.subr.bf16.mxu0 0
      %990 = vmatpush1.bf16.msra.mxu0 0
      %991 = vmatprep.subr.bf16.mxu0 0
      %992 = vmatpush1.bf16.msra.mxu0 0
      %993 = vmatprep.subr.bf16.mxu0 0
      %994 = vmatpush1.bf16.msra.mxu0 0
      %995 = vmatprep.subr.bf16.mxu0 0
      %996 = vmatpush1.bf16.msra.mxu0 0
      %997 = vmatprep.subr.bf16.mxu0 0
      %998 = vmatpush1.bf16.msra.mxu0 0
      %999 = vmatprep.subr.bf16.mxu0 0
      %1000 = vmatpush1.bf16.msra.mxu0 0
      %1001 = vmatprep.subr.bf16.mxu0 0
      %1002 = vmatpush1.bf16.msra.mxu0 0
      %1003 = vmatprep.mubr.bf16.mxu0 0
      %1004 = vmatmul.mubr.bf16.gmra.mrb[0].mxu0 %v963
      %v1005 = vpop.f32.mrb[0].mxu0
      %v1006 = vadd.f32 0.0, %v1005
      %v1007 = vpop.f32.mrb[0].mxu0
      %v1008 = vadd.f32 0.0, %v1007
      %v1009 = vpop.f32.mrb[0].mxu0
      %v1010 = vpop.f32.mrb[0].mxu0
      %1011 = vdwg.mxu0
      %v1012 = vadd.f32 %v941, %v1006
      %v1013 = vadd.f32 %v942, %v1008
      %1014 = vrot.lane.b32.xlu0 %v562, 17
      %v1015 = vpop.permute.xlu0 %1014
      %v1016 = vrot.slane %v1015, 4
      %v1017 = vsel %vm491, %v1016, %v1015
      %v1020 = vmul.bf16 %v785, %v1017
      %v1021 = vmul.bf16 %v786, %v1016
      %s1022 = scalar_lea.vmem %s1, 32
      %v1023 = vld [vmem:[%s1022] sm:$0xf]
      %v1026 = vunpack.c.l.b16 %v1020
      %v1027 = vunpack.c.h.b16 %v1020
      %v1028 = vunpack.c.l.b16 %v1021
      %v1029 = vpack.c.b16 %v1026, %v1026
      %v1030 = vpack.c.b16 %v1027, %v1027
      %v1031 = vpack.c.b16 %v1028, %v1028
      %1032 = vrot.lane.b32.xlu0 %v1029, 111
      %v1033 = vpop.permute.xlu0 %1032
      %1034 = vrot.lane.b32.xlu0 %v1030, 111
      %v1035 = vpop.permute.xlu0 %1034
      %1036 = vrot.lane.b32.xlu0 %v1031, 111
      %v1037 = vpop.permute.xlu0 %1036
      %v1038 = vsel %vm399, %v1033, %v1035
      %v1039 = vsel %vm399, %v1035, %v1037
      %v1041 = vsel %vm425, %v1023, 0
      %v1044 = vsel %vm429, %v1038, 0
      %v1047 = vsel %vm429, %v1039, 0
      %1049 = vmatprep.subr.bf16.mxu0 %v1047
      %1050 = vmatpush1.bf16.msra.mxu0 %v1044
      %1051 = vmatprep.subr.bf16.mxu0 0
      %1052 = vmatpush1.bf16.msra.mxu0 0
      %1053 = vmatprep.subr.bf16.mxu0 0
      %1054 = vmatpush1.bf16.msra.mxu0 0
      %1055 = vmatprep.subr.bf16.mxu0 0
      %1056 = vmatpush1.bf16.msra.mxu0 0
      %1057 = vmatprep.subr.bf16.mxu0 0
      %1058 = vmatpush1.bf16.msra.mxu0 0
      %1059 = vmatprep.subr.bf16.mxu0 0
      %1060 = vmatpush1.bf16.msra.mxu0 0
      %1061 = vmatprep.subr.bf16.mxu0 0
      %1062 = vmatpush1.bf16.msra.mxu0 0
      %1063 = vmatprep.subr.bf16.mxu0 0
      %1064 = vmatpush1.bf16.msra.mxu0 0
      %1065 = vmatprep.subr.bf16.mxu0 0
      %1066 = vmatpush1.bf16.msra.mxu0 0
      %1067 = vmatprep.subr.bf16.mxu0 0
      %1068 = vmatpush1.bf16.msra.mxu0 0
      %1069 = vmatprep.subr.bf16.mxu0 0
      %1070 = vmatpush1.bf16.msra.mxu0 0
      %1071 = vmatprep.subr.bf16.mxu0 0
      %1072 = vmatpush1.bf16.msra.mxu0 0
      %1073 = vmatprep.subr.bf16.mxu0 0
      %1074 = vmatpush1.bf16.msra.mxu0 0
      %1075 = vmatprep.subr.bf16.mxu0 0
      %1076 = vmatpush1.bf16.msra.mxu0 0
      %1077 = vmatprep.subr.bf16.mxu0 0
      %1078 = vmatpush1.bf16.msra.mxu0 0
      %1079 = vmatprep.subr.bf16.mxu0 0
      %1080 = vmatpush1.bf16.msra.mxu0 0
      %1081 = vmatprep.mubr.bf16.mxu0 0
      %1082 = vmatmul.mubr.bf16.gmra.mrb[0].mxu0 %v1041
      %v1083 = vpop.f32.mrb[0].mxu0
      %v1084 = vadd.f32 0.0, %v1083
      %v1085 = vpop.f32.mrb[0].mxu0
      %v1086 = vadd.f32 0.0, %v1085
      %v1087 = vpop.f32.mrb[0].mxu0
      %v1088 = vpop.f32.mrb[0].mxu0
      %1089 = vdwg.mxu0
      %v1090 = vadd.f32 %v1012, %v1084
      %v1091 = vadd.f32 %v1013, %v1086
      %v1092 = vld [vmem:[#allocation3] sm:$0x1]
      %s1093 = vtos %v1092
      %v1094 = vstv %s1093
      %v1095 = vmul.f32 %v282, %v1094
      %v1097 = vcombine.high %v1095, %v1095
      %v1099 = vcombine.low %v1095, %v1095
      %v1101 = vsel %vm429, %v1095, %v1099
      %v1102 = vsel %vm429, %v1097, %v1095
      %v1103 = vadd.f32 %v1090, %v1101
      %v1104 = vadd.f32 %v1091, %v1102
      %1105 = vst [vmem:[%s280] sm:$0xff] %v1103
      %1106 = vst [vmem:[%s280 + $0x8] sm:$0xff] %v1104
      %p1107 = scmp.lt.s32.totalorder %s20, 1
      %s1108 = scalar_select %p1107, %s20, 1
      %s1109 = smul.addr %s1108, 2
      %s1110 = smul.addr %s1109, 8
      %s1111 = scalar_lea.vmem %s7, %s1110
      // Predicated region
      $region49: #{basic_block_transpose_modified_forward.1} parent=47 // pred_check
        %p1112 = pneg %p190
      $region50: #{basic_block_transpose_modified_forward.1} parent=47 // pred_check_branch
        %1114 = sbr.rel (%p1112) target = $region52
      $region51: #{basic_block_transpose_modified_forward.1} parent=47 // pred_region
        _
      $region52: #{basic_block_transpose_modified_forward.1} parent=47 // pred_fallthru
        _
    $region48: #{basic_block_transpose_modified_forward.1} parent=5 // pred_fallthru
      _
    %p1115 = scmp.le.s32.totalorder 2, %s15
    // Predicated region
    $region53: #{basic_block_transpose_modified_forward.1} parent=5 // pred_check
      %p1116 = pneg %p1115
    $region54: #{basic_block_transpose_modified_forward.1} parent=5 // pred_check_branch
      %1118 = sbr.rel (%p1116) target = $region56
    $region55: #{basic_block_transpose_modified_forward.1} parent=5 // pred_region
      %s1119 = ssub.s32 %s15, 2
      // Predicated region
      $region57: #{basic_block_transpose_modified_forward.1} parent=55 // pred_check
        %p1120 = pneg %p196
      $region58: #{basic_block_transpose_modified_forward.1} parent=55 // pred_check_branch
        %1122 = sbr.rel (%p1120) target = $region60
      $region59: #{basic_block_transpose_modified_forward.1} parent=55 // pred_region
        %p1123 = scmp.lt.s32.totalorder %s21, 1
        %s1124 = scalar_select %p1123, %s21, 1
        %s1125 = smul.addr %s1124, 2
        %s1126 = smul.addr %s1125, 8
        %s1127 = scalar_lea.vmem %s7, %s1126
      $region60: #{basic_block_transpose_modified_forward.1} parent=55 // pred_fallthru
        _
    $region56: #{basic_block_transpose_modified_forward.1} parent=5 // pred_fallthru
      _
  $region6: #{basic_block_transpose_modified_forward.1} parent=0 // loop_footer
    %s19 = sadd.s32 1, %s15
  $region7: #{basic_block_transpose_modified_forward.1} parent=0 // loop_footer_branch
    %14 = sbr.rel target = $region3
  $region8: #{basic_block_transpose_modified_forward.1} parent=0 // loop_exit
    _

</llo_original>
